<compile_context>
chip_gen: v6e
topology: v6e:2x2x1
jax: 0.10.0
libtpu: 0.0.40
codegen_flags: <defaults>
</compile_context>

<pallas_src>
import jax
import jax.numpy as jnp
from jax import lax
from jax.experimental import pallas as pl
from jax.experimental.pallas import tpu as pltpu


def task_embedding_kernel(x_ref, w1_ref, b1_ref, w2_ref, b2_ref, w3_ref, b3_ref, o_ref):
    x = x_ref[...]

    # Linear(input_dim -> hidden) + ReLU (Dropout = identity in eval mode).
    # K=32 here is small, but layer 1 is <8% of FLOPs: intentionally left alone.
    h1 = jnp.dot(x, w1_ref[...], preferred_element_type=jnp.float32) + b1_ref[...]
    h1 = jnp.maximum(h1, 0.0)

    # Linear(hidden -> hidden) + ReLU. Cast activations back to the weight dtype so
    # the bf16 path keeps the MXU in native bf16 input width (f32 path is a no-op).
    h2 = jnp.dot(h1.astype(w2_ref.dtype), w2_ref[...],
                 preferred_element_type=jnp.float32) + b2_ref[...]
    h2 = jnp.maximum(h2, 0.0)

    # Linear(hidden -> embedding_dim).
    emb = jnp.dot(h2.astype(w3_ref.dtype), w3_ref[...],
                  preferred_element_type=jnp.float32) + b3_ref[...]

    # F.normalize(p=2, dim=1): emb / max(||emb||_2, 1e-12) == emb * rsqrt(max(sq, 1e-24)).
    sq = jnp.sum(emb * emb, axis=1, keepdims=True)   # XLU cross-lane reduce (free slot)
    inv = lax.rsqrt(jnp.maximum(sq, 1e-24))          # EUP slot (free vs VPU divide)
    o_ref[...] = (emb * inv).astype(o_ref.dtype)


def _round_up(v, m):
    return ((v + m - 1) // m) * m


def task_embedding_forward(x, w1, b1, w2, b2, w3, b3, *,
                           block_b=1024,
                           compute_dtype=jnp.bfloat16,
                           out_dtype=None):
    """Fused forward pass.

    compute_dtype: dtype for x and the three weight matrices (default bf16 — the
      fast path on all TPU generations; f32 accumulation is kept inside the kernel;
      biases stay f32). Pass None or jnp.float32 for a bit-exact f32 path.
    out_dtype: output dtype (default: x's original dtype). jnp.bfloat16 halves the
      dominant per-row HBM write.
    """
    B, D_in = x.shape
    H = w1.shape[1]
    E = w3.shape[1]

    if out_dtype is None:
        out_dtype = x.dtype

    if compute_dtype is not None:
        x = x.astype(compute_dtype)
        w1 = w1.astype(compute_dtype)
        w2 = w2.astype(compute_dtype)
        w3 = w3.astype(compute_dtype)

    # Batch tile: multiple of 16 rows (bf16 packs 2 rows/sublane; 16 is also a
    # multiple of the f32 sublane rule of 8). Ensure >= 2 grid steps when B is big
    # enough so v7x's 2 TensorCores both get work; on v5e/v6e the grid is a serial
    # loop, so block_b is kept large to amortize the ~0.35 us per-step overhead.
    sublane = 16 if jnp.dtype(x.dtype).itemsize < 4 else 8
    if B <= 2 * sublane:
        TB = B                                   # single full-batch tile
    else:
        tb = min(block_b, pl.cdiv(B, 2))         # at least 2 grid steps
        TB = min(_round_up(tb, sublane), B)
    grid = (pl.cdiv(B, TB),)

    # Weights/biases: constant index_map -> VMEM-resident, fetched exactly once.
    # Single-buffered: no point paying 2x VMEM for blocks that never change.
    def weight_spec(arr):
        return pl.BlockSpec(arr.shape, lambda i: (0, 0),
                            pipeline_mode=pl.Buffered(1))

    # Guard the VMEM-resident-weights assumption (binds first on v7x: 64 MiB
    # physical, 32 MiB scoped default).
    itemsize = lambda a: a.size * a.dtype.itemsize
    resident_bytes = sum(itemsize(a) for a in (w1, b1, w2, b2, w3, b3))
    if resident_bytes > 24 * 1024 * 1024:
        # TODO(synk): for scaled-up hidden_dim, add a K-tiled grid axis with an f32
        # accumulator (init/finalize via pl.when) instead of whole-weight residency.
        raise ValueError(
            f"weights ({resident_bytes} B) too large for the VMEM-resident strategy; "
            "use bf16 weights and/or add K tiling.")

    # Honest cost estimate from post-cast dtypes and the chosen output dtype.
    # (On v7x each of the 2 TCs fetches its own weight copy; not modeled here.)
    out_bytes = B * E * jnp.dtype(out_dtype).itemsize
    cost = pl.CostEstimate(
        flops=2 * B * (D_in * H + H * H + H * E),
        transcendentals=B,                       # one rsqrt per row
        bytes_accessed=itemsize(x) + resident_bytes + out_bytes,
    )

    return pl.pallas_call(
        task_embedding_kernel,
        out_shape=jax.ShapeDtypeStruct((B, E), out_dtype),
        grid=grid,
        in_specs=[
            pl.BlockSpec((TB, D_in), lambda i: (i, 0)),
            weight_spec(w1), weight_spec(b1),
            weight_spec(w2), weight_spec(b2),
            weight_spec(w3), weight_spec(b3),
        ],
        out_specs=pl.BlockSpec((TB, E), lambda i: (i, 0)),
        compiler_params=pltpu.CompilerParams(
            dimension_semantics=("parallel",)),   # megacore sharding on v7x
        cost_estimate=cost,
    )(x, w1, b1, w2, b2, w3, b3)


def init_params(key, input_dim, hidden_dim, embedding_dim):
    """Deterministic init mirroring nn.Linear shapes (stored transposed: (in, out))."""
    k1, k2, k3, k4, k5, k6 = jax.random.split(key, 6)

    def linear_init(kw, kb, fan_in, fan_out):
        bound = 1.0 / jnp.sqrt(fan_in)
        w = jax.random.uniform(kw, (fan_in, fan_out), jnp.float32, -bound, bound)
        b = jax.random.uniform(kb, (1, fan_out), jnp.float32, -bound, bound)
        return w, b

    w1, b1 = linear_init(k1, k2, input_dim, hidden_dim)
    w2, b2 = linear_init(k3, k4, hidden_dim, hidden_dim)
    w3, b3 = linear_init(k5, k6, hidden_dim, embedding_dim)
    return w1, b1, w2, b2, w3, b3


def reference_forward(x, w1, b1, w2, b2, w3, b3):
    h1 = jnp.maximum(x @ w1 + b1, 0.0)
    h2 = jnp.maximum(h1 @ w2 + b2, 0.0)
    e = h2 @ w3 + b3
    return e / jnp.maximum(jnp.linalg.norm(e, axis=1, keepdims=True), 1e-12)


if __name__ == "__main__":
    # Shapes consistent with the module: input_dim=32, hidden=256, embedding=128.
    INPUT_DIM, HIDDEN_DIM, EMBEDDING_DIM = 32, 256, 128

    key = jax.random.PRNGKey(0)
    kx, kp, kx2, kx3 = jax.random.split(key, 4)
    params = init_params(kp, INPUT_DIM, HIDDEN_DIM, EMBEDDING_DIM)

    # --- bit-exact f32 path, single-tile grid (B=8) ---
    B = 8
    x = jax.random.normal(kx, (B, INPUT_DIM), dtype=jnp.float32)
    ref = reference_forward(x, *params)
    out_f32 = jax.block_until_ready(
        task_embedding_forward(x, *params, compute_dtype=jnp.float32))
    assert out_f32.shape == (B, EMBEDDING_DIM) and out_f32.dtype == jnp.float32
    assert jnp.allclose(out_f32, ref, atol=1e-4, rtol=1e-4), "f32 path mismatch"

    # --- default fast path: bf16 operands, f32 accumulation, f32 output (B=8) ---
    out_def = jax.block_until_ready(task_embedding_forward(x, *params))
    assert out_def.shape == (B, EMBEDDING_DIM)
    assert jnp.allclose(out_def, ref, atol=2e-2, rtol=2e-2), "bf16 default path mismatch"

    # --- bf16-output fast path, multi-step batch grid (B=64 -> TB=32 -> 2 steps) ---
    B2 = 64
    x2 = jax.random.normal(kx2, (B2, INPUT_DIM), dtype=jnp.float32)
    ref2 = reference_forward(x2, *params)
    out2 = jax.block_until_ready(
        task_embedding_forward(x2, *params, out_dtype=jnp.bfloat16))
    assert out2.shape == (B2, EMBEDDING_DIM) and out2.dtype == jnp.bfloat16
    assert jnp.allclose(out2.astype(jnp.float32), ref2, atol=3e-2, rtol=3e-2), \
        "bf16-out tiled-grid mismatch"

    # --- ragged batch (B=50 -> TB=32, partial trailing tile) ---
    B3 = 50
    x3 = jax.random.normal(kx3, (B3, INPUT_DIM), dtype=jnp.float32)
    ref3 = reference_forward(x3, *params)
    out3 = jax.block_until_ready(task_embedding_forward(x3, *params))
    assert out3.shape == (B3, EMBEDDING_DIM)
    assert jnp.allclose(out3, ref3, atol=2e-2, rtol=2e-2), "ragged-batch mismatch"

    print("KERNEL_OK")
</pallas_src>

<mosaic_0001>
module attributes {stable_mosaic.version = 11 : i64} {
  func.func @task_embedding_kernel(%arg0: i32, %arg1: memref<8x32xf32, #tpu.memory_space<vmem>>, %arg2: memref<32x256xf32, #tpu.memory_space<vmem>>, %arg3: memref<1x256xf32, #tpu.memory_space<vmem>>, %arg4: memref<256x256xf32, #tpu.memory_space<vmem>>, %arg5: memref<1x256xf32, #tpu.memory_space<vmem>>, %arg6: memref<256x128xf32, #tpu.memory_space<vmem>>, %arg7: memref<1x128xf32, #tpu.memory_space<vmem>>, %arg8: memref<8x128xf32, #tpu.memory_space<vmem>>) attributes {dimension_semantics = [#tpu.dimension_semantics<parallel>], iteration_bounds = array<i64: 1>, scalar_prefetch = 0 : i64, scratch_operands = 0 : i64, tpu.core_type = #tpu.core_type<tc>, window_params = [{transform_indices = @transform_0, window_bounds = array<i64: 8, 32>}, {pipeline_mode = #tpu.pipeline_mode<synchronous>, transform_indices = @transform_1, window_bounds = array<i64: 32, 256>}, {pipeline_mode = #tpu.pipeline_mode<synchronous>, transform_indices = @transform_2, window_bounds = array<i64: 1, 256>}, {pipeline_mode = #tpu.pipeline_mode<synchronous>, transform_indices = @transform_3, window_bounds = array<i64: 256, 256>}, {pipeline_mode = #tpu.pipeline_mode<synchronous>, transform_indices = @transform_4, window_bounds = array<i64: 1, 256>}, {pipeline_mode = #tpu.pipeline_mode<synchronous>, transform_indices = @transform_5, window_bounds = array<i64: 256, 128>}, {pipeline_mode = #tpu.pipeline_mode<synchronous>, transform_indices = @transform_6, window_bounds = array<i64: 1, 128>}, {transform_indices = @transform_7, window_bounds = array<i64: 8, 128>}]} {
    %c0 = arith.constant 0 : index
    %c0_0 = arith.constant 0 : index
    %0 = vector.load %arg1[%c0, %c0_0] : memref<8x32xf32, #tpu.memory_space<vmem>>, vector<8x32xf32>
    %c0_1 = arith.constant 0 : index
    %c0_2 = arith.constant 0 : index
    %1 = vector.load %arg2[%c0_1, %c0_2] : memref<32x256xf32, #tpu.memory_space<vmem>>, vector<32x256xf32>
    %cst = arith.constant dense<0.000000e+00> : vector<8x256xf32>
    %2 = tpu.matmul %0, %1, %cst {dimension_numbers = #tpu.dot_dimension_numbers<[1], [0], [0], [1], [0, 0, 1, 1], [], []>} : vector<8x32xf32>, vector<32x256xf32>, vector<8x256xf32> -> vector<8x256xf32>
    %c0_3 = arith.constant 0 : index
    %c0_4 = arith.constant 0 : index
    %3 = vector.load %arg3[%c0_3, %c0_4] : memref<1x256xf32, #tpu.memory_space<vmem>>, vector<1x256xf32>
    %4 = vector.broadcast %3 : vector<1x256xf32> to vector<8x256xf32>
    %5 = arith.addf %2, %4 : vector<8x256xf32>
    %cst_5 = arith.constant 0.000000e+00 : f32
    %6 = vector.broadcast %cst_5 : f32 to vector<8x256xf32>
    %7 = arith.maximumf %5, %6 : vector<8x256xf32>
    %c0_6 = arith.constant 0 : index
    %c0_7 = arith.constant 0 : index
    %8 = vector.load %arg4[%c0_6, %c0_7] : memref<256x256xf32, #tpu.memory_space<vmem>>, vector<256x256xf32>
    %cst_8 = arith.constant dense<0.000000e+00> : vector<8x256xf32>
    %9 = tpu.matmul %7, %8, %cst_8 {dimension_numbers = #tpu.dot_dimension_numbers<[1], [0], [0], [1], [0, 0, 1, 1], [], []>} : vector<8x256xf32>, vector<256x256xf32>, vector<8x256xf32> -> vector<8x256xf32>
    %c0_9 = arith.constant 0 : index
    %c0_10 = arith.constant 0 : index
    %10 = vector.load %arg5[%c0_9, %c0_10] : memref<1x256xf32, #tpu.memory_space<vmem>>, vector<1x256xf32>
    %11 = vector.broadcast %10 : vector<1x256xf32> to vector<8x256xf32>
    %12 = arith.addf %9, %11 : vector<8x256xf32>
    %cst_11 = arith.constant 0.000000e+00 : f32
    %13 = vector.broadcast %cst_11 : f32 to vector<8x256xf32>
    %14 = arith.maximumf %12, %13 : vector<8x256xf32>
    %c0_12 = arith.constant 0 : index
    %c0_13 = arith.constant 0 : index
    %15 = vector.load %arg6[%c0_12, %c0_13] : memref<256x128xf32, #tpu.memory_space<vmem>>, vector<256x128xf32>
    %cst_14 = arith.constant dense<0.000000e+00> : vector<8x128xf32>
    %16 = tpu.matmul %14, %15, %cst_14 {dimension_numbers = #tpu.dot_dimension_numbers<[1], [0], [0], [1], [0, 0, 1, 1], [], []>} : vector<8x256xf32>, vector<256x128xf32>, vector<8x128xf32> -> vector<8x128xf32>
    %c0_15 = arith.constant 0 : index
    %c0_16 = arith.constant 0 : index
    %17 = vector.load %arg7[%c0_15, %c0_16] : memref<1x128xf32, #tpu.memory_space<vmem>>, vector<1x128xf32>
    %18 = vector.broadcast %17 : vector<1x128xf32> to vector<8x128xf32>
    %19 = arith.addf %16, %18 : vector<8x128xf32>
    %20 = arith.mulf %19, %19 : vector<8x128xf32>
    %cst_17 = arith.constant dense<0.000000e+00> : vector<8xf32>
    %21 = vector.multi_reduction <add>, %20, %cst_17 [1] : vector<8x128xf32> to vector<8xf32>
    %22 = vector.shape_cast %21 : vector<8xf32> to vector<8x1xf32>
    %cst_18 = arith.constant 1.000000e-24 : f32
    %23 = vector.broadcast %cst_18 : f32 to vector<8x1xf32>
    %24 = arith.maximumf %22, %23 : vector<8x1xf32>
    %25 = math.rsqrt %24 : vector<8x1xf32>
    %26 = vector.broadcast %25 : vector<8x1xf32> to vector<8x128xf32>
    %27 = arith.mulf %19, %26 : vector<8x128xf32>
    %c0_19 = arith.constant 0 : index
    %c0_20 = arith.constant 0 : index
    %28 = vector.load %arg8[%c0_19, %c0_20] : memref<8x128xf32, #tpu.memory_space<vmem>>, vector<8x128xf32>
    tpu.vector_store %arg8[%c0_19, %c0_20], %27 {strides = array<i32>} : memref<8x128xf32, #tpu.memory_space<vmem>>, vector<8x128xf32>,
    return
  }
  func.func @transform_0(%arg0: i32) -> (i32, i32) {
    %c0_i32 = arith.constant 0 : i32
    %c0_i32_0 = arith.constant 0 : i32
    return %arg0, %c0_i32 : i32, i32
  }
  func.func @transform_1(%arg0: i32) -> (i32, i32) {
    %c0_i32 = arith.constant 0 : i32
    %c0_i32_0 = arith.constant 0 : i32
    %c0_i32_1 = arith.constant 0 : i32
    return %c0_i32, %c0_i32_0 : i32, i32
  }
  func.func @transform_2(%arg0: i32) -> (i32, i32) {
    %c0_i32 = arith.constant 0 : i32
    %c0_i32_0 = arith.constant 0 : i32
    %c0_i32_1 = arith.constant 0 : i32
    return %c0_i32, %c0_i32_0 : i32, i32
  }
  func.func @transform_3(%arg0: i32) -> (i32, i32) {
    %c0_i32 = arith.constant 0 : i32
    %c0_i32_0 = arith.constant 0 : i32
    %c0_i32_1 = arith.constant 0 : i32
    return %c0_i32, %c0_i32_0 : i32, i32
  }
  func.func @transform_4(%arg0: i32) -> (i32, i32) {
    %c0_i32 = arith.constant 0 : i32
    %c0_i32_0 = arith.constant 0 : i32
    %c0_i32_1 = arith.constant 0 : i32
    return %c0_i32, %c0_i32_0 : i32, i32
  }
  func.func @transform_5(%arg0: i32) -> (i32, i32) {
    %c0_i32 = arith.constant 0 : i32
    %c0_i32_0 = arith.constant 0 : i32
    %c0_i32_1 = arith.constant 0 : i32
    return %c0_i32, %c0_i32_0 : i32, i32
  }
  func.func @transform_6(%arg0: i32) -> (i32, i32) {
    %c0_i32 = arith.constant 0 : i32
    %c0_i32_0 = arith.constant 0 : i32
    %c0_i32_1 = arith.constant 0 : i32
    return %c0_i32, %c0_i32_0 : i32, i32
  }
  func.func @transform_7(%arg0: i32) -> (i32, i32) {
    %c0_i32 = arith.constant 0 : i32
    %c0_i32_0 = arith.constant 0 : i32
    return %arg0, %c0_i32 : i32, i32
  }
}

</mosaic_0001>

<llo_original>
// kernel: tpu_custom_call.1
$region0: #{tpu_custom_call.1}
  #allocation0 [shape = 'u32[]', space=smem, size = 0x4, offset = 0x4, fixed_abs, tag = 'smem constant byte address 0x4 - core index']
  #allocation1 [shape = 'u32[144,128]{1,0:T(1,128)}', space=vmem, size = 0x12000, scoped, tag = 'internal scratch']
  %s0 = inlined_call_operand.hbm [shape: f32[8,32], index: 0, kind: input, shape index: {}]
  %s1 = inlined_call_operand.hbm [shape: f32[32,256], index: 1, kind: input, shape index: {}]
  %s2 = inlined_call_operand.vmem [shape: f32[1,256], index: 2, kind: input, shape index: {}]
  %s3 = inlined_call_operand.hbm [shape: f32[256,256], index: 3, kind: input, shape index: {}]
  %s4 = inlined_call_operand.vmem [shape: f32[1,256], index: 4, kind: input, shape index: {}]
  %s5 = inlined_call_operand.hbm [shape: f32[256,128], index: 5, kind: input, shape index: {}]
  %s6 = inlined_call_operand.vmem [shape: f32[1,128], index: 6, kind: input, shape index: {}]
  %s7 = inlined_call_operand.hbm [shape: f32[8,128], index: 7, kind: output, shape index: {}]
  %s8 = sld [smem:[#allocation0]]
  $region54: #{tpu_custom_call.1} parent=0
    _
  %s10 = ssub.s32 1, %s8
  %s11 = scalar_select 0, %s10, %s8
  $region1: #{tpu_custom_call.1} parent=0
    #allocation2 [shape = 'u8[4096]{0}', space=vmem, size = 0x1000, scoped, tag = 'input window, operand 0, single buffered']
    #allocation3 [shape = 's32[1]{0}', space=sflag, size = 0x4, scoped, tag = 'scoped memory for tpu_custom_call.1']
    #allocation4 [shape = 's32[1]{0}', space=sflag, size = 0x4, scoped, tag = 'scoped memory for tpu_custom_call.1']
    #allocation5 [shape = 'u8[32768]{0}', space=vmem, size = 0x8000, scoped, tag = 'input window, operand 1, single buffered']
    #allocation6 [shape = 's32[1]{0}', space=sflag, size = 0x4, scoped, tag = 'scoped memory for tpu_custom_call.1']
    #allocation7 [shape = 'u8[262144]{0}', space=vmem, size = 0x40000, scoped, tag = 'input window, operand 3, single buffered']
    #allocation8 [shape = 'u8[131072]{0}', space=vmem, size = 0x20000, scoped, tag = 'input window, operand 5, single buffered']
    #allocation9 [shape = 's32[1]{0}', space=sflag, size = 0x4, scoped, tag = 'scoped memory for tpu_custom_call.1']
    #allocation10 [shape = 'u8[4096]{0}', space=vmem, size = 0x1000, scoped, tag = 'output window, operand 0, single buffered']
    %12 = vsyncpa [#allocation3], 0
    %13 = vsyncpa [#allocation6], 0
    %14 = vsyncpa [#allocation9], 0
    %15 = vsyncpa [#allocation4], 0
    // Predicated region
    $region2: #{tpu_custom_call.1} parent=1 // pred_check
      _
    $region3: #{tpu_custom_call.1} parent=1 // pred_check_branch
      %17 = sbr.rel (0) target = $region5
    $region4: #{tpu_custom_call.1} parent=1 // pred_region
      %s19 = ssub.s32 128, 128
      %20 = vsyncadd [#allocation3], %s19
      %s22 = sshll.u32 [#allocation2], 4
      %s23 = int_to_ptr.vmem [resolvable:$true] %s22
      %25 = dma.hbm_to_vmem [thread:$0]  %s0, 128, %s23, [#allocation3]
    $region5: #{tpu_custom_call.1} parent=1 // pred_fallthru
      _
    // Predicated region
    $region6: #{tpu_custom_call.1} parent=1 // pred_check
      _
    $region7: #{tpu_custom_call.1} parent=1 // pred_check_branch
      %27 = sbr.rel (0) target = $region9
    $region8: #{tpu_custom_call.1} parent=1 // pred_region
      %s29 = ssub.s32 1024, 1024
      %30 = vsyncadd [#allocation6], %s29
      %s31 = sshll.u32 [#allocation5], 4
      %s32 = int_to_ptr.vmem [resolvable:$true] %s31
      %37 = dma.hbm_to_vmem [thread:$0]  %s1, 1024, %s32, [#allocation6], 256, 256, 16
    $region9: #{tpu_custom_call.1} parent=1 // pred_fallthru
      _
    // Predicated region
    $region10: #{tpu_custom_call.1} parent=1 // pred_check
      _
    $region11: #{tpu_custom_call.1} parent=1 // pred_check_branch
      %39 = sbr.rel (0) target = $region13
    $region12: #{tpu_custom_call.1} parent=1 // pred_region
      _
    $region13: #{tpu_custom_call.1} parent=1 // pred_fallthru
      _
    // Predicated region
    $region14: #{tpu_custom_call.1} parent=1 // pred_check
      _
    $region15: #{tpu_custom_call.1} parent=1 // pred_check_branch
      %41 = sbr.rel (0) target = $region17
    $region16: #{tpu_custom_call.1} parent=1 // pred_region
      %s43 = ssub.s32 8192, 8192
      %44 = vsyncadd [#allocation6], %s43
      %s45 = sshll.u32 [#allocation7], 4
      %s46 = int_to_ptr.vmem [resolvable:$true] %s45
      %51 = dma.hbm_to_vmem [thread:$0]  %s3, 8192, %s46, [#allocation6], 256, 256, 16
    $region17: #{tpu_custom_call.1} parent=1 // pred_fallthru
      _
    // Predicated region
    $region18: #{tpu_custom_call.1} parent=1 // pred_check
      _
    $region19: #{tpu_custom_call.1} parent=1 // pred_check_branch
      %53 = sbr.rel (0) target = $region21
    $region20: #{tpu_custom_call.1} parent=1 // pred_region
      _
    $region21: #{tpu_custom_call.1} parent=1 // pred_fallthru
      _
    // Predicated region
    $region22: #{tpu_custom_call.1} parent=1 // pred_check
      _
    $region23: #{tpu_custom_call.1} parent=1 // pred_check_branch
      %55 = sbr.rel (0) target = $region25
    $region24: #{tpu_custom_call.1} parent=1 // pred_region
      %s57 = ssub.s32 4096, 4096
      %58 = vsyncadd [#allocation9], %s57
      %s59 = sshll.u32 [#allocation8], 4
      %s60 = int_to_ptr.vmem [resolvable:$true] %s59
      %65 = dma.hbm_to_vmem [thread:$0]  %s5, 4096, %s60, [#allocation9], 128, 128, 8
    $region25: #{tpu_custom_call.1} parent=1 // pred_fallthru
      _
    // Predicated region
    $region26: #{tpu_custom_call.1} parent=1 // pred_check
      _
    $region27: #{tpu_custom_call.1} parent=1 // pred_check_branch
      %67 = sbr.rel (0) target = $region29
    $region28: #{tpu_custom_call.1} parent=1 // pred_region
      _
    $region29: #{tpu_custom_call.1} parent=1 // pred_fallthru
      _
    // Predicated region
    $region30: #{tpu_custom_call.1} parent=1 // pred_check
      _
    $region31: #{tpu_custom_call.1} parent=1 // pred_check_branch
      %69 = sbr.rel (0) target = $region33
    $region32: #{tpu_custom_call.1} parent=1 // pred_region
      %70 = dma.done [#allocation3], 128
    $region33: #{tpu_custom_call.1} parent=1 // pred_fallthru
      _
    // Predicated region
    $region34: #{tpu_custom_call.1} parent=1 // pred_check
      _
    $region35: #{tpu_custom_call.1} parent=1 // pred_check_branch
      %72 = sbr.rel (0) target = $region37
    $region36: #{tpu_custom_call.1} parent=1 // pred_region
      %73 = dma.done [#allocation6], 1024
    $region37: #{tpu_custom_call.1} parent=1 // pred_fallthru
      _
    // Predicated region
    $region38: #{tpu_custom_call.1} parent=1 // pred_check
      _
    $region39: #{tpu_custom_call.1} parent=1 // pred_check_branch
      %75 = sbr.rel (0) target = $region41
    $region40: #{tpu_custom_call.1} parent=1 // pred_region
      %76 = dma.done [#allocation6], 8192
    $region41: #{tpu_custom_call.1} parent=1 // pred_fallthru
      _
    // Predicated region
    $region42: #{tpu_custom_call.1} parent=1 // pred_check
      _
    $region43: #{tpu_custom_call.1} parent=1 // pred_check_branch
      %78 = sbr.rel (0) target = $region45
    $region44: #{tpu_custom_call.1} parent=1 // pred_region
      %79 = dma.done [#allocation9], 4096
    $region45: #{tpu_custom_call.1} parent=1 // pred_fallthru
      _
    %v80 = vld [vmem:[#allocation2] sm:$0xff]
    %v81 = vld [vmem:[#allocation5] sm:$0xff]
    %v82 = vld [vmem:[#allocation5 + $0x8] sm:$0xff]
    %v83 = vld [vmem:[#allocation5 + $0x10] sm:$0xff]
    %v84 = vld [vmem:[#allocation5 + $0x18] sm:$0xff]
    %v85 = vld [vmem:[#allocation5 + $0x20] sm:$0xff]
    %v86 = vld [vmem:[#allocation5 + $0x28] sm:$0xff]
    %v87 = vld [vmem:[#allocation5 + $0x30] sm:$0xff]
    %v88 = vld [vmem:[#allocation5 + $0x38] sm:$0xff]
    %v89 = vld [vmem:[%s2] sm:$0x3]
    %v91 = vlaneseq
    %v92 = vshrl.u32 %v91, 7
    %v93 = vsub.s32 0, %v92
    %v94 = vrot.slane %v89, %v93
    %v95 = vlaneseq
    %v96 = vshrl.u32 %v95, 7
    %v97 = vsub.s32 1, %v96
    %v98 = vrot.slane %v89, %v97
    %vm101 = vcmask 261120
    %v103 = vsel %vm101, %v80, 0
    %105 = vmatprep.subr.mxu0 0.0
    %106 = vmatpush1.msra.mxu0 0.0
    %107 = vmatprep.subr.mxu0 0.0
    %108 = vmatpush1.msra.mxu0 0.0
    %109 = vmatprep.subr.mxu0 0.0
    %110 = vmatpush1.msra.mxu0 0.0
    %111 = vmatprep.subr.mxu0 0.0
    %112 = vmatpush1.msra.mxu0 0.0
    %113 = vmatprep.subr.mxu0 0.0
    %114 = vmatpush1.msra.mxu0 0.0
    %115 = vmatprep.subr.mxu0 0.0
    %116 = vmatpush1.msra.mxu0 0.0
    %117 = vmatprep.subr.mxu0 0.0
    %118 = vmatpush1.msra.mxu0 0.0
    %119 = vmatprep.subr.mxu0 0.0
    %120 = vmatpush1.msra.mxu0 0.0
    %121 = vmatprep.subr.mxu0 0.0
    %122 = vmatpush1.msra.mxu0 0.0
    %123 = vmatprep.subr.mxu0 0.0
    %124 = vmatpush1.msra.mxu0 0.0
    %125 = vmatprep.subr.mxu0 0.0
    %126 = vmatpush1.msra.mxu0 0.0
    %127 = vmatprep.subr.mxu0 0.0
    %128 = vmatpush1.msra.mxu0 0.0
    %129 = vmatprep.subr.mxu0 %v88
    %130 = vmatpush1.msra.mxu0 %v87
    %131 = vmatprep.subr.mxu0 %v86
    %132 = vmatpush1.msra.mxu0 %v85
    %133 = vmatprep.subr.mxu0 %v84
    %134 = vmatpush1.msra.mxu0 %v83
    %135 = vmatprep.subr.mxu0 %v82
    %136 = vmatpush1.msra.mxu0 %v81
    %137 = vmatprep.subr.mxu0 0.0
    %138 = vmatpush2.msra.mxu0 0.0
    %139 = vmatprep.subr.mxu0 0.0
    %140 = vmatpush2.msra.mxu0 0.0
    %141 = vmatprep.subr.mxu0 0.0
    %142 = vmatpush2.msra.mxu0 0.0
    %143 = vmatprep.subr.mxu0 0.0
    %144 = vmatpush2.msra.mxu0 0.0
    %145 = vmatprep.subr.mxu0 0.0
    %146 = vmatpush2.msra.mxu0 0.0
    %147 = vmatprep.subr.mxu0 0.0
    %148 = vmatpush2.msra.mxu0 0.0
    %149 = vmatprep.subr.mxu0 0.0
    %150 = vmatpush2.msra.mxu0 0.0
    %151 = vmatprep.subr.mxu0 0.0
    %152 = vmatpush2.msra.mxu0 0.0
    %153 = vmatprep.subr.mxu0 0.0
    %154 = vmatpush2.msra.mxu0 0.0
    %155 = vmatprep.subr.mxu0 0.0
    %156 = vmatpush2.msra.mxu0 0.0
    %157 = vmatprep.subr.mxu0 0.0
    %158 = vmatpush2.msra.mxu0 0.0
    %159 = vmatprep.subr.mxu0 0.0
    %160 = vmatpush2.msra.mxu0 0.0
    %161 = vmatprep.subr.mxu0 0.0
    %162 = vmatpush2.msra.mxu0 0.0
    %163 = vmatprep.subr.mxu0 0.0
    %164 = vmatpush2.msra.mxu0 0.0
    %165 = vmatprep.subr.mxu0 0.0
    %166 = vmatpush2.msra.mxu0 0.0
    %167 = vmatprep.subr.mxu0 0.0
    %168 = vmatpush2.msra.mxu0 0.0
    %169 = vmatprep.mubr.f32.mxu0 0.0
    %170 = vmatmul.mubr.f32.gmra.mxu0 %v103
    %v171 = vpop.f32.mrf.mxu0
    %v172 = vadd.f32 %v94, %v171
    %v173 = vpop.f32.mrf.mxu0
    %v174 = vadd.f32 %v98, %v173
    %175 = vdwg.mxu0
    %v176 = vmax.f32 %v172, 0.0
    %v177 = vmax.f32 %v174, 0.0
    %v178 = vld [vmem:[#allocation7] sm:$0xff]
    %v179 = vld [vmem:[#allocation7 + $0x8] sm:$0xff]
    %v180 = vld [vmem:[#allocation7 + $0x10] sm:$0xff]
    %v181 = vld [vmem:[#allocation7 + $0x18] sm:$0xff]
    %v182 = vld [vmem:[#allocation7 + $0x20] sm:$0xff]
    %v183 = vld [vmem:[#allocation7 + $0x28] sm:$0xff]
    %v184 = vld [vmem:[#allocation7 + $0x30] sm:$0xff]
    %v185 = vld [vmem:[#allocation7 + $0x38] sm:$0xff]
    %v186 = vld [vmem:[#allocation7 + $0x40] sm:$0xff]
    %v187 = vld [vmem:[#allocation7 + $0x48] sm:$0xff]
    %v188 = vld [vmem:[#allocation7 + $0x50] sm:$0xff]
    %v189 = vld [vmem:[#allocation7 + $0x58] sm:$0xff]
    %v190 = vld [vmem:[#allocation7 + $0x60] sm:$0xff]
    %v191 = vld [vmem:[#allocation7 + $0x68] sm:$0xff]
    %v192 = vld [vmem:[#allocation7 + $0x70] sm:$0xff]
    %v193 = vld [vmem:[#allocation7 + $0x78] sm:$0xff]
    %v194 = vld [vmem:[#allocation7 + $0x80] sm:$0xff]
    %v195 = vld [vmem:[#allocation7 + $0x88] sm:$0xff]
    %v196 = vld [vmem:[#allocation7 + $0x90] sm:$0xff]
    %v197 = vld [vmem:[#allocation7 + $0x98] sm:$0xff]
    %v198 = vld [vmem:[#allocation7 + $0xa0] sm:$0xff]
    %v199 = vld [vmem:[#allocation7 + $0xa8] sm:$0xff]
    %v200 = vld [vmem:[#allocation7 + $0xb0] sm:$0xff]
    %v201 = vld [vmem:[#allocation7 + $0xb8] sm:$0xff]
    %v202 = vld [vmem:[#allocation7 + $0xc0] sm:$0xff]
    %v203 = vld [vmem:[#allocation7 + $0xc8] sm:$0xff]
    %v204 = vld [vmem:[#allocation7 + $0xd0] sm:$0xff]
    %v205 = vld [vmem:[#allocation7 + $0xd8] sm:$0xff]
    %v206 = vld [vmem:[#allocation7 + $0xe0] sm:$0xff]
    %v207 = vld [vmem:[#allocation7 + $0xe8] sm:$0xff]
    %v208 = vld [vmem:[#allocation7 + $0xf0] sm:$0xff]
    %v209 = vld [vmem:[#allocation7 + $0xf8] sm:$0xff]
    %v210 = vld [vmem:[#allocation7 + $0x100] sm:$0xff]
    %v211 = vld [vmem:[#allocation7 + $0x108] sm:$0xff]
    %v212 = vld [vmem:[#allocation7 + $0x110] sm:$0xff]
    %v213 = vld [vmem:[#allocation7 + $0x118] sm:$0xff]
    %v214 = vld [vmem:[#allocation7 + $0x120] sm:$0xff]
    %v215 = vld [vmem:[#allocation7 + $0x128] sm:$0xff]
    %v216 = vld [vmem:[#allocation7 + $0x130] sm:$0xff]
    %v217 = vld [vmem:[#allocation7 + $0x138] sm:$0xff]
    %v218 = vld [vmem:[#allocation7 + $0x140] sm:$0xff]
    %v219 = vld [vmem:[#allocation7 + $0x148] sm:$0xff]
    %v220 = vld [vmem:[#allocation7 + $0x150] sm:$0xff]
    %v221 = vld [vmem:[#allocation7 + $0x158] sm:$0xff]
    %v222 = vld [vmem:[#allocation7 + $0x160] sm:$0xff]
    %v223 = vld [vmem:[#allocation7 + $0x168] sm:$0xff]
    %v224 = vld [vmem:[#allocation7 + $0x170] sm:$0xff]
    %v225 = vld [vmem:[#allocation7 + $0x178] sm:$0xff]
    %v226 = vld [vmem:[#allocation7 + $0x180] sm:$0xff]
    %v227 = vld [vmem:[#allocation7 + $0x188] sm:$0xff]
    %v228 = vld [vmem:[#allocation7 + $0x190] sm:$0xff]
    %v229 = vld [vmem:[#allocation7 + $0x198] sm:$0xff]
    %v230 = vld [vmem:[#allocation7 + $0x1a0] sm:$0xff]
    %v231 = vld [vmem:[#allocation7 + $0x1a8] sm:$0xff]
    %v232 = vld [vmem:[#allocation7 + $0x1b0] sm:$0xff]
    %v233 = vld [vmem:[#allocation7 + $0x1b8] sm:$0xff]
    %v234 = vld [vmem:[#allocation7 + $0x1c0] sm:$0xff]
    %v235 = vld [vmem:[#allocation7 + $0x1c8] sm:$0xff]
    %v236 = vld [vmem:[#allocation7 + $0x1d0] sm:$0xff]
    %v237 = vld [vmem:[#allocation7 + $0x1d8] sm:$0xff]
    %v238 = vld [vmem:[#allocation7 + $0x1e0] sm:$0xff]
    %v239 = vld [vmem:[#allocation7 + $0x1e8] sm:$0xff]
    %v240 = vld [vmem:[#allocation7 + $0x1f0] sm:$0xff]
    %v241 = vld [vmem:[#allocation7 + $0x1f8] sm:$0xff]
    %v242 = vld [vmem:[%s4] sm:$0x3]
    %v244 = vlaneseq
    %v245 = vshrl.u32 %v244, 7
    %v246 = vsub.s32 0, %v245
    %v247 = vrot.slane %v242, %v246
    %v248 = vlaneseq
    %v249 = vshrl.u32 %v248, 7
    %v250 = vsub.s32 1, %v249
    %v251 = vrot.slane %v242, %v250
    %254 = vmatprep.subr.mxu0 %v209
    %255 = vmatpush1.msra.mxu0 %v208
    %256 = vmatprep.subr.mxu0 %v207
    %257 = vmatpush1.msra.mxu0 %v206
    %258 = vmatprep.subr.mxu0 %v205
    %259 = vmatpush1.msra.mxu0 %v204
    %260 = vmatprep.subr.mxu0 %v203
    %261 = vmatpush1.msra.mxu0 %v202
    %262 = vmatprep.subr.mxu0 %v201
    %263 = vmatpush1.msra.mxu0 %v200
    %264 = vmatprep.subr.mxu0 %v199
    %265 = vmatpush1.msra.mxu0 %v198
    %266 = vmatprep.subr.mxu0 %v197
    %267 = vmatpush1.msra.mxu0 %v196
    %268 = vmatprep.subr.mxu0 %v195
    %269 = vmatpush1.msra.mxu0 %v194
    %270 = vmatprep.subr.mxu0 %v193
    %271 = vmatpush1.msra.mxu0 %v192
    %272 = vmatprep.subr.mxu0 %v191
    %273 = vmatpush1.msra.mxu0 %v190
    %274 = vmatprep.subr.mxu0 %v189
    %275 = vmatpush1.msra.mxu0 %v188
    %276 = vmatprep.subr.mxu0 %v187
    %277 = vmatpush1.msra.mxu0 %v186
    %278 = vmatprep.subr.mxu0 %v185
    %279 = vmatpush1.msra.mxu0 %v184
    %280 = vmatprep.subr.mxu0 %v183
    %281 = vmatpush1.msra.mxu0 %v182
    %282 = vmatprep.subr.mxu0 %v181
    %283 = vmatpush1.msra.mxu0 %v180
    %284 = vmatprep.subr.mxu0 %v179
    %285 = vmatpush1.msra.mxu0 %v178
    %286 = vmatprep.subr.mxu0 %v241
    %287 = vmatpush2.msra.mxu0 %v240
    %288 = vmatprep.subr.mxu0 %v239
    %289 = vmatpush2.msra.mxu0 %v238
    %290 = vmatprep.subr.mxu0 %v237
    %291 = vmatpush2.msra.mxu0 %v236
    %292 = vmatprep.subr.mxu0 %v235
    %293 = vmatpush2.msra.mxu0 %v234
    %294 = vmatprep.subr.mxu0 %v233
    %295 = vmatpush2.msra.mxu0 %v232
    %296 = vmatprep.subr.mxu0 %v231
    %297 = vmatpush2.msra.mxu0 %v230
    %298 = vmatprep.subr.mxu0 %v229
    %299 = vmatpush2.msra.mxu0 %v228
    %300 = vmatprep.subr.mxu0 %v227
    %301 = vmatpush2.msra.mxu0 %v226
    %302 = vmatprep.subr.mxu0 %v225
    %303 = vmatpush2.msra.mxu0 %v224
    %304 = vmatprep.subr.mxu0 %v223
    %305 = vmatpush2.msra.mxu0 %v222
    %306 = vmatprep.subr.mxu0 %v221
    %307 = vmatpush2.msra.mxu0 %v220
    %308 = vmatprep.subr.mxu0 %v219
    %309 = vmatpush2.msra.mxu0 %v218
    %310 = vmatprep.subr.mxu0 %v217
    %311 = vmatpush2.msra.mxu0 %v216
    %312 = vmatprep.subr.mxu0 %v215
    %313 = vmatpush2.msra.mxu0 %v214
    %314 = vmatprep.subr.mxu0 %v213
    %315 = vmatpush2.msra.mxu0 %v212
    %316 = vmatprep.subr.mxu0 %v211
    %317 = vmatpush2.msra.mxu0 %v210
    %318 = vmatprep.mubr.f32.mxu0 %v177
    %319 = vmatmul.mubr.f32.gmra.mxu0 %v176
    %v320 = vpop.f32.mrf.mxu0
    %v321 = vadd.f32 %v247, %v320
    %v322 = vpop.f32.mrf.mxu0
    %v323 = vadd.f32 %v251, %v322
    %324 = vdwg.mxu0
    %v325 = vmax.f32 %v321, 0.0
    %v326 = vmax.f32 %v323, 0.0
    %v327 = vld [vmem:[#allocation8] sm:$0xff]
    %v328 = vld [vmem:[#allocation8 + $0x8] sm:$0xff]
    %v329 = vld [vmem:[#allocation8 + $0x10] sm:$0xff]
    %v330 = vld [vmem:[#allocation8 + $0x18] sm:$0xff]
    %v331 = vld [vmem:[#allocation8 + $0x20] sm:$0xff]
    %v332 = vld [vmem:[#allocation8 + $0x28] sm:$0xff]
    %v333 = vld [vmem:[#allocation8 + $0x30] sm:$0xff]
    %v334 = vld [vmem:[#allocation8 + $0x38] sm:$0xff]
    %v335 = vld [vmem:[#allocation8 + $0x40] sm:$0xff]
    %v336 = vld [vmem:[#allocation8 + $0x48] sm:$0xff]
    %v337 = vld [vmem:[#allocation8 + $0x50] sm:$0xff]
    %v338 = vld [vmem:[#allocation8 + $0x58] sm:$0xff]
    %v339 = vld [vmem:[#allocation8 + $0x60] sm:$0xff]
    %v340 = vld [vmem:[#allocation8 + $0x68] sm:$0xff]
    %v341 = vld [vmem:[#allocation8 + $0x70] sm:$0xff]
    %v342 = vld [vmem:[#allocation8 + $0x78] sm:$0xff]
    %v343 = vld [vmem:[#allocation8 + $0x80] sm:$0xff]
    %v344 = vld [vmem:[#allocation8 + $0x88] sm:$0xff]
    %v345 = vld [vmem:[#allocation8 + $0x90] sm:$0xff]
    %v346 = vld [vmem:[#allocation8 + $0x98] sm:$0xff]
    %v347 = vld [vmem:[#allocation8 + $0xa0] sm:$0xff]
    %v348 = vld [vmem:[#allocation8 + $0xa8] sm:$0xff]
    %v349 = vld [vmem:[#allocation8 + $0xb0] sm:$0xff]
    %v350 = vld [vmem:[#allocation8 + $0xb8] sm:$0xff]
    %v351 = vld [vmem:[#allocation8 + $0xc0] sm:$0xff]
    %v352 = vld [vmem:[#allocation8 + $0xc8] sm:$0xff]
    %v353 = vld [vmem:[#allocation8 + $0xd0] sm:$0xff]
    %v354 = vld [vmem:[#allocation8 + $0xd8] sm:$0xff]
    %v355 = vld [vmem:[#allocation8 + $0xe0] sm:$0xff]
    %v356 = vld [vmem:[#allocation8 + $0xe8] sm:$0xff]
    %v357 = vld [vmem:[#allocation8 + $0xf0] sm:$0xff]
    %v358 = vld [vmem:[#allocation8 + $0xf8] sm:$0xff]
    %v359 = vld [vmem:[%s6] sm:$0x1]
    %v361 = vlaneseq
    %v362 = vshrl.u32 %v361, 7
    %v363 = vsub.s32 0, %v362
    %v364 = vrot.slane %v359, %v363
    %366 = vmatprep.subr.mxu0 0.0
    %367 = vmatpush1.msra.mxu0 %v342
    %368 = vmatprep.subr.mxu0 0.0
    %369 = vmatpush1.msra.mxu0 %v341
    %370 = vmatprep.subr.mxu0 0.0
    %371 = vmatpush1.msra.mxu0 %v340
    %372 = vmatprep.subr.mxu0 0.0
    %373 = vmatpush1.msra.mxu0 %v339
    %374 = vmatprep.subr.mxu0 0.0
    %375 = vmatpush1.msra.mxu0 %v338
    %376 = vmatprep.subr.mxu0 0.0
    %377 = vmatpush1.msra.mxu0 %v337
    %378 = vmatprep.subr.mxu0 0.0
    %379 = vmatpush1.msra.mxu0 %v336
    %380 = vmatprep.subr.mxu0 0.0
    %381 = vmatpush1.msra.mxu0 %v335
    %382 = vmatprep.subr.mxu0 0.0
    %383 = vmatpush1.msra.mxu0 %v334
    %384 = vmatprep.subr.mxu0 0.0
    %385 = vmatpush1.msra.mxu0 %v333
    %386 = vmatprep.subr.mxu0 0.0
    %387 = vmatpush1.msra.mxu0 %v332
    %388 = vmatprep.subr.mxu0 0.0
    %389 = vmatpush1.msra.mxu0 %v331
    %390 = vmatprep.subr.mxu0 0.0
    %391 = vmatpush1.msra.mxu0 %v330
    %392 = vmatprep.subr.mxu0 0.0
    %393 = vmatpush1.msra.mxu0 %v329
    %394 = vmatprep.subr.mxu0 0.0
    %395 = vmatpush1.msra.mxu0 %v328
    %396 = vmatprep.subr.mxu0 0.0
    %397 = vmatpush1.msra.mxu0 %v327
    %398 = vmatprep.subr.mxu0 0.0
    %399 = vmatpush2.msra.mxu0 %v358
    %400 = vmatprep.subr.mxu0 0.0
    %401 = vmatpush2.msra.mxu0 %v357
    %402 = vmatprep.subr.mxu0 0.0
    %403 = vmatpush2.msra.mxu0 %v356
    %404 = vmatprep.subr.mxu0 0.0
    %405 = vmatpush2.msra.mxu0 %v355
    %406 = vmatprep.subr.mxu0 0.0
    %407 = vmatpush2.msra.mxu0 %v354
    %408 = vmatprep.subr.mxu0 0.0
    %409 = vmatpush2.msra.mxu0 %v353
    %410 = vmatprep.subr.mxu0 0.0
    %411 = vmatpush2.msra.mxu0 %v352
    %412 = vmatprep.subr.mxu0 0.0
    %413 = vmatpush2.msra.mxu0 %v351
    %414 = vmatprep.subr.mxu0 0.0
    %415 = vmatpush2.msra.mxu0 %v350
    %416 = vmatprep.subr.mxu0 0.0
    %417 = vmatpush2.msra.mxu0 %v349
    %418 = vmatprep.subr.mxu0 0.0
    %419 = vmatpush2.msra.mxu0 %v348
    %420 = vmatprep.subr.mxu0 0.0
    %421 = vmatpush2.msra.mxu0 %v347
    %422 = vmatprep.subr.mxu0 0.0
    %423 = vmatpush2.msra.mxu0 %v346
    %424 = vmatprep.subr.mxu0 0.0
    %425 = vmatpush2.msra.mxu0 %v345
    %426 = vmatprep.subr.mxu0 0.0
    %427 = vmatpush2.msra.mxu0 %v344
    %428 = vmatprep.subr.mxu0 0.0
    %429 = vmatpush2.msra.mxu0 %v343
    %430 = vmatprep.mubr.f32.mxu0 %v326
    %431 = vmatmul.mubr.f32.gmra.mxu0 %v325
    %v432 = vpop.f32.mrf.mxu0
    %v433 = vadd.f32 %v364, %v432
    %v434 = vpop.f32.mrf.mxu0
    %435 = vdwg.mxu0
    %v436 = vmul.f32 %v433, %v433
    %437 = vadd.xlane.f32.xlu0 %v436
    %v438 = vpop.xlane.xlu0 %437
    %v439 = vmax.f32 %v438, 1e-24
    %v440 = vrsqrt.pop %v439
    %v441 = vmul.f32 %v433, %v440
    %442 = vst [vmem:[#allocation10] sm:$0xff] %v441
    // Predicated region
    $region46: #{tpu_custom_call.1} parent=1 // pred_check
      _
    $region47: #{tpu_custom_call.1} parent=1 // pred_check_branch
      %444 = sbr.rel (0) target = $region49
    $region48: #{tpu_custom_call.1} parent=1 // pred_region
      %s446 = ssub.s32 128, 128
      %447 = vsyncadd [#allocation4], %s446
      %s449 = sshll.u32 [#allocation10], 4
      %s450 = int_to_ptr.vmem [resolvable:$true] %s449
      %452 = dma.vmem_to_hbm [thread:$0]  %s450, 128, %s7, [#allocation4]
    $region49: #{tpu_custom_call.1} parent=1 // pred_fallthru
      _
    // Predicated region
    $region50: #{tpu_custom_call.1} parent=1 // pred_check
      _
    $region51: #{tpu_custom_call.1} parent=1 // pred_check_branch
      %454 = sbr.rel (0) target = $region53
    $region52: #{tpu_custom_call.1} parent=1 // pred_region
      %455 = dma.done [#allocation4], 128
    $region53: #{tpu_custom_call.1} parent=1 // pred_fallthru
      _
    %456 = vsyncpa [#allocation3], 1
    %457 = vsyncpa [#allocation6], 1
    %458 = vsyncpa [#allocation9], 1
    %459 = vsyncpa [#allocation4], 1

</llo_original>
